<compile_context>
chip_gen: v7x
topology: tpu7x:2x2x1
jax: 0.10.0
libtpu: 0.0.40
codegen_flags: <defaults>
</compile_context>

<pallas_src>
import functools

import jax
import jax.numpy as jnp
from jax import lax
from jax.experimental import pallas as pl
from jax.experimental.pallas import tpu as pltpu


# --------------------------------- kernels -----------------------------------
def aspp_fused_kernel(x_ref, w1_ref, b1_ref, w2_ref, b2_ref, o_ref):
    """Small-channel path: all three dilated 3x3 branches in one MXU pass.

    x_ref  : (tm, Kp)   x0|x1|x2 im2col patches, zero-padded to Kp (128) lanes
    w1_ref : (Kp, N1)   block-diag(W_d1, W_d6, W_d18), N1 = 3*Cout
    b1_ref : (1, N1)    concat of branch biases (f32)
    w2_ref : (N1, Np)   final 1x1 conv weight, zero-padded to Np (>=128) lanes
    b2_ref : (1, Np)    final bias, zero-padded (f32)
    o_ref  : (tm, Np)   lane-dense output tile
    """
    z = jnp.dot(x_ref[...], w1_ref[...],
                preferred_element_type=jnp.float32) + b1_ref[...]
    a = jnp.maximum(z, 0.0)                    # f32 elementwise (no bf16 VPU on v5e)
    y = jnp.dot(a.astype(w2_ref.dtype), w2_ref[...],
                preferred_element_type=jnp.float32)
    o_ref[...] = (y + b2_ref[...]).astype(o_ref.dtype)


def aspp_branch_kernel(x0_ref, x1_ref, x2_ref, w_ref, b_ref, wf_ref, bf_ref, o_ref):
    """General path (larger Cin): per-branch dense im2col matmuls, fused 1x1.

    x{0,1,2}_ref : (tm, K1p)        im2col patches per dilation, K padded to 128x
    w_ref        : (3, K1p, Cout)   per-branch conv weights (rows zero-padded)
    b_ref        : (3, 1, Cout)     per-branch biases (f32)
    wf_ref       : (3, Cout, Np)    final 1x1 weight split per branch, lane-padded
    bf_ref       : (1, Np)          final bias (f32), lane-padded
    o_ref        : (tm, Np)         lane-dense output tile
    """
    acc = jnp.zeros(o_ref.shape, jnp.float32)
    for r, x_ref in enumerate((x0_ref, x1_ref, x2_ref)):
        z = jnp.dot(x_ref[...], w_ref[r],
                    preferred_element_type=jnp.float32) + b_ref[r]
        a = jnp.maximum(z, 0.0)
        acc = acc + jnp.dot(a.astype(wf_ref.dtype), wf_ref[r],
                            preferred_element_type=jnp.float32)
    o_ref[...] = (acc + bf_ref[...]).astype(o_ref.dtype)


# ---------------------------- plain-JAX layout glue ---------------------------
def _round_up(x, m):
    return ((x + m - 1) // m) * m


def _im2col_dilated(x_nhwc, d):
    """(B,H,W,Cin) -> (B*H*W, 9*Cin) patches for 3x3 conv, dilation=d, 'same' pad."""
    B, H, W, Cin = x_nhwc.shape
    xp = jnp.pad(x_nhwc, ((0, 0), (d, d), (d, d), (0, 0)))
    taps = []
    for dy in range(3):
        for dx in range(3):
            taps.append(xp[:, dy * d:dy * d + H, dx * d:dx * d + W, :])
    p = jnp.stack(taps, axis=3)                       # (B, H, W, 9, Cin)
    return p.reshape(B * H * W, 9 * Cin)


def _branch_weight(w_oihw):
    """PyTorch (Cout, Cin, 3, 3) -> dense (9*Cin, Cout), K index = (dy*3+dx)*Cin + c."""
    cout = w_oihw.shape[0]
    return jnp.transpose(w_oihw, (2, 3, 1, 0)).reshape(-1, cout)


def _choose_tm(M, tm_target, min_steps=8):
    """Largest 16-aligned M-tile <= tm_target; once there is plenty of work,
    keep >= min_steps grid steps so both v7x TCs get tiles and the pipeline has depth."""
    tm = min(int(tm_target), M)
    if M > min_steps * 512:
        tm = min(tm, M // min_steps)
    return max(16, (tm // 16) * 16)


# ----------------------------------- wrapper ----------------------------------
@functools.partial(jax.jit,
                   static_argnames=("dilations", "tm", "compute_dtype", "use_fused"))
def aspp_forward(x_nchw, ws, bs, wf, bf, *, dilations=(1, 6, 18), tm=1024,
                 compute_dtype=jnp.bfloat16, use_fused=None):
    """ASPP forward.  x_nchw: (B, Cin, H, W) -> (B, Cout, H, W)."""
    assert len(dilations) == 3 and len(ws) == 3 and len(bs) == 3
    B, Cin, H, W = x_nchw.shape
    Cout = ws[0].shape[0]
    M = B * H * W
    K1 = 9 * Cin
    N1 = 3 * Cout
    Np = _round_up(max(Cout, 128), 128)          # lane-dense output width
    cdt = compute_dtype
    cbytes = jnp.dtype(cdt).itemsize
    obytes = jnp.dtype(x_nchw.dtype).itemsize

    if use_fused is None:                        # fused block-diag path only when
        use_fused = (3 * K1 <= 128) and (N1 <= 128)   # the zero-fill is free (1 MXU pass)

    # tiling over flattened output pixels
    tm = _choose_tm(M, tm)
    Mp = _round_up(M, tm)
    grid = (Mp // tm,)

    # data-layout glue (no FLOPs): NCHW->NHWC + im2col per dilation
    x_nhwc = jnp.transpose(x_nchw, (0, 2, 3, 1))
    xcols = [_im2col_dilated(x_nhwc, d) for d in dilations]

    flops = 2 * M * (3 * K1 * Cout + N1 * Cout)
    wfT = jnp.transpose(wf[:, :, 0, 0])                         # (3*Cout, Cout)

    if use_fused:
        # ---- single-stream, block-diagonal small-channel path ----
        Ktot = 3 * K1
        Kp = _round_up(Ktot, 128)
        xcat = jnp.concatenate(xcols, axis=1)                   # (M, 3*9*Cin)
        xcat = jnp.pad(xcat, ((0, Mp - M), (0, Kp - Ktot))).astype(cdt)

        w1 = jnp.zeros((Kp, N1), cdt)
        for r, w in enumerate(ws):
            w1 = w1.at[r * K1:(r + 1) * K1,
                       r * Cout:(r + 1) * Cout].set(_branch_weight(w).astype(cdt))
        b1 = jnp.concatenate([b.reshape(-1) for b in bs]).reshape(1, N1)
        b1 = b1.astype(jnp.float32)
        w2 = jnp.zeros((N1, Np), cdt).at[:, :Cout].set(wfT.astype(cdt))
        b2 = jnp.zeros((1, Np), jnp.float32).at[0, :Cout].set(bf.astype(jnp.float32))

        bytes_acc = (Mp * Kp * cbytes + Mp * Np * obytes
                     + (Kp * N1 + N1 * Np) * cbytes + (N1 + Np) * 4)
        est_vmem = (2 * tm * Kp * cbytes + 2 * tm * Np * obytes
                    + 2 * (Kp * N1 + N1 * Np) * cbytes + (1 << 20))
        vmem_limit = int(min(64 << 20, max(32 << 20, 3 * est_vmem // 2)))

        out_flat = pl.pallas_call(
            aspp_fused_kernel,
            out_shape=jax.ShapeDtypeStruct((Mp, Np), x_nchw.dtype),
            grid_spec=pltpu.PrefetchScalarGridSpec(
                num_scalar_prefetch=0,
                grid=grid,
                in_specs=[
                    pl.BlockSpec((tm, Kp), lambda i: (i, 0)),      # streamed, lane-dense
                    pl.BlockSpec((Kp, N1), lambda i: (0, 0)),      # resident
                    pl.BlockSpec((1, N1), lambda i: (0, 0)),       # resident
                    pl.BlockSpec((N1, Np), lambda i: (0, 0)),      # resident
                    pl.BlockSpec((1, Np), lambda i: (0, 0)),       # resident
                ],
                out_specs=pl.BlockSpec((tm, Np), lambda i: (i, 0)),
            ),
            compiler_params=pltpu.CompilerParams(
                dimension_semantics=("parallel",),
                vmem_limit_bytes=vmem_limit),
            cost_estimate=pl.CostEstimate(flops=flops, transcendentals=0,
                                          bytes_accessed=bytes_acc),
        )(xcat, w1, b1, w2, b2)
    else:
        # ---- general per-branch path (larger Cin) ----
        K1p = _round_up(K1, 128)
        xcols = [jnp.pad(c, ((0, Mp - M), (0, K1p - K1))).astype(cdt) for c in xcols]

        w_stack = jnp.zeros((3, K1p, Cout), cdt)
        for r, w in enumerate(ws):
            w_stack = w_stack.at[r, :K1, :].set(_branch_weight(w).astype(cdt))
        b_stack = jnp.stack(list(bs), 0).reshape(3, 1, Cout).astype(jnp.float32)
        wf_stack = jnp.zeros((3, Cout, Np), cdt).at[:, :, :Cout].set(
            wfT.reshape(3, Cout, Cout).astype(cdt))
        bf_row = jnp.zeros((1, Np), jnp.float32).at[0, :Cout].set(bf.astype(jnp.float32))

        # Constant-index_map weights never change block: once they are big
        # enough to matter on v7x's 64 MiB VMEM, drop the default double buffer.
        w_bytes = (w_stack.size + wf_stack.size) * cbytes
        wkw = dict(pipeline_mode=pl.Buffered(1)) if w_bytes > (4 << 20) else {}

        bytes_acc = (3 * Mp * K1p * cbytes + Mp * Np * obytes
                     + (3 * K1p * Cout + 3 * Cout * Np) * cbytes
                     + (3 * Cout + Np) * 4)
        est_vmem = (2 * 3 * tm * K1p * cbytes + 2 * tm * Np * obytes
                    + 2 * w_bytes + (1 << 20))
        vmem_limit = int(min(64 << 20, max(32 << 20, 3 * est_vmem // 2)))

        out_flat = pl.pallas_call(
            aspp_branch_kernel,
            out_shape=jax.ShapeDtypeStruct((Mp, Np), x_nchw.dtype),
            grid_spec=pltpu.PrefetchScalarGridSpec(
                num_scalar_prefetch=0,
                grid=grid,
                in_specs=[
                    pl.BlockSpec((tm, K1p), lambda i: (i, 0)),
                    pl.BlockSpec((tm, K1p), lambda i: (i, 0)),
                    pl.BlockSpec((tm, K1p), lambda i: (i, 0)),
                    pl.BlockSpec((3, K1p, Cout), lambda i: (0, 0, 0), **wkw),
                    pl.BlockSpec((3, 1, Cout), lambda i: (0, 0, 0)),
                    pl.BlockSpec((3, Cout, Np), lambda i: (0, 0, 0), **wkw),
                    pl.BlockSpec((1, Np), lambda i: (0, 0)),
                ],
                out_specs=pl.BlockSpec((tm, Np), lambda i: (i, 0)),
            ),
            compiler_params=pltpu.CompilerParams(
                dimension_semantics=("parallel",),
                vmem_limit_bytes=vmem_limit),
            cost_estimate=pl.CostEstimate(flops=flops, transcendentals=0,
                                          bytes_accessed=bytes_acc),
        )(xcols[0], xcols[1], xcols[2], w_stack, b_stack, wf_stack, bf_row)

    out = out_flat[:M, :Cout].reshape(B, H, W, Cout)
    return jnp.transpose(out, (0, 3, 1, 2))


# ----------------- pure-JAX reference (for correctness check) -----------------
def _conv_ref(x, w, b, d):
    y = lax.conv_general_dilated(x, w, window_strides=(1, 1),
                                 padding=((d, d), (d, d)), rhs_dilation=(d, d),
                                 dimension_numbers=("NCHW", "OIHW", "NCHW"))
    return y + b.reshape(1, -1, 1, 1)


def aspp_ref(x, ws, bs, wf, bf, dilations):
    outs = [jnp.maximum(_conv_ref(x, w, b, d), 0.0)
            for w, b, d in zip(ws, bs, dilations)]
    cat = jnp.concatenate(outs, axis=1)
    y = lax.conv_general_dilated(cat, wf, window_strides=(1, 1),
                                 padding=((0, 0), (0, 0)),
                                 dimension_numbers=("NCHW", "OIHW", "NCHW"))
    return y + bf.reshape(1, -1, 1, 1)


if __name__ == "__main__":
    key = jax.random.PRNGKey(0)
    keys = jax.random.split(key, 9)

    B, Cin, H, W = 2, 4, 16, 16
    Cout = 8
    dilations = (1, 6, 18)

    x = jax.random.normal(keys[0], (B, Cin, H, W), jnp.float32)
    ws = tuple(jax.random.normal(keys[1 + r], (Cout, Cin, 3, 3), jnp.float32)
               * (1.0 / (9 * Cin) ** 0.5) for r in range(3))
    bs = tuple(jax.random.normal(keys[4 + r], (Cout,), jnp.float32) * 0.1
               for r in range(3))
    wf = jax.random.normal(keys[7], (Cout, 3 * Cout, 1, 1), jnp.float32) \
        * (1.0 / (3 * Cout) ** 0.5)
    bf = jax.random.normal(keys[8], (Cout,), jnp.float32) * 0.1

    ref = aspp_ref(x, ws, bs, wf, bf, dilations)

    # fused small-channel path, f32 streams: tight tolerance
    out_f32 = jax.block_until_ready(
        aspp_forward(x, ws, bs, wf, bf, dilations=dilations,
                     compute_dtype=jnp.float32))
    assert out_f32.shape == (B, Cout, H, W), out_f32.shape
    assert jnp.allclose(out_f32, ref, atol=1e-4, rtol=1e-4), \
        float(jnp.max(jnp.abs(out_f32 - ref)))

    # default path: bf16 streams (MXU-native), f32 accumulation: looser tolerance
    out_bf16 = jax.block_until_ready(
        aspp_forward(x, ws, bs, wf, bf, dilations=dilations))
    assert jnp.allclose(out_bf16, ref, atol=1e-1, rtol=1e-1), \
        float(jnp.max(jnp.abs(out_bf16 - ref)))

    # general per-branch path (production large-Cin code path), forced, f32: tight
    out_gen = jax.block_until_ready(
        aspp_forward(x, ws, bs, wf, bf, dilations=dilations,
                     compute_dtype=jnp.float32, use_fused=False))
    assert jnp.allclose(out_gen, ref, atol=1e-4, rtol=1e-4), \
        float(jnp.max(jnp.abs(out_gen - ref)))

    print("KERNEL_OK")
</pallas_src>

<mosaic_0001>
module attributes {stable_mosaic.version = 11 : i64} {
  func.func @aspp_fused_kernel(%arg0: i32, %arg1: memref<512x128xf32, #tpu.memory_space<vmem>>, %arg2: memref<128x24xf32, #tpu.memory_space<vmem>>, %arg3: memref<1x24xf32, #tpu.memory_space<vmem>>, %arg4: memref<24x128xf32, #tpu.memory_space<vmem>>, %arg5: memref<1x128xf32, #tpu.memory_space<vmem>>, %arg6: memref<512x128xf32, #tpu.memory_space<vmem>>) attributes {dimension_semantics = [#tpu.dimension_semantics<parallel>], iteration_bounds = array<i64: 1>, scalar_prefetch = 0 : i64, scratch_operands = 0 : i64, tpu.core_type = #tpu.core_type<tc>, window_params = [{transform_indices = @transform_0, window_bounds = array<i64: 512, 128>}, {pipeline_mode = #tpu.pipeline_mode<synchronous>, transform_indices = @transform_1, window_bounds = array<i64: 128, 24>}, {pipeline_mode = #tpu.pipeline_mode<synchronous>, transform_indices = @transform_2, window_bounds = array<i64: 1, 24>}, {pipeline_mode = #tpu.pipeline_mode<synchronous>, transform_indices = @transform_3, window_bounds = array<i64: 24, 128>}, {pipeline_mode = #tpu.pipeline_mode<synchronous>, transform_indices = @transform_4, window_bounds = array<i64: 1, 128>}, {transform_indices = @transform_5, window_bounds = array<i64: 512, 128>}]} {
    %c0 = arith.constant 0 : index
    %c0_0 = arith.constant 0 : index
    %0 = vector.load %arg1[%c0, %c0_0] : memref<512x128xf32, #tpu.memory_space<vmem>>, vector<512x128xf32>
    %c0_1 = arith.constant 0 : index
    %c0_2 = arith.constant 0 : index
    %1 = vector.load %arg2[%c0_1, %c0_2] : memref<128x24xf32, #tpu.memory_space<vmem>>, vector<128x24xf32>
    %cst = arith.constant dense<0.000000e+00> : vector<512x24xf32>
    %2 = tpu.matmul %0, %1, %cst {dimension_numbers = #tpu.dot_dimension_numbers<[1], [0], [0], [1], [0, 0, 1, 1], [], []>} : vector<512x128xf32>, vector<128x24xf32>, vector<512x24xf32> -> vector<512x24xf32>
    %c0_3 = arith.constant 0 : index
    %c0_4 = arith.constant 0 : index
    %3 = vector.load %arg3[%c0_3, %c0_4] : memref<1x24xf32, #tpu.memory_space<vmem>>, vector<1x24xf32>
    %4 = vector.broadcast %3 : vector<1x24xf32> to vector<512x24xf32>
    %5 = arith.addf %2, %4 : vector<512x24xf32>
    %cst_5 = arith.constant 0.000000e+00 : f32
    %6 = vector.broadcast %cst_5 : f32 to vector<512x24xf32>
    %7 = arith.maximumf %5, %6 : vector<512x24xf32>
    %c0_6 = arith.constant 0 : index
    %c0_7 = arith.constant 0 : index
    %8 = vector.load %arg4[%c0_6, %c0_7] : memref<24x128xf32, #tpu.memory_space<vmem>>, vector<24x128xf32>
    %cst_8 = arith.constant dense<0.000000e+00> : vector<512x128xf32>
    %9 = tpu.matmul %7, %8, %cst_8 {dimension_numbers = #tpu.dot_dimension_numbers<[1], [0], [0], [1], [0, 0, 1, 1], [], []>} : vector<512x24xf32>, vector<24x128xf32>, vector<512x128xf32> -> vector<512x128xf32>
    %c0_9 = arith.constant 0 : index
    %c0_10 = arith.constant 0 : index
    %10 = vector.load %arg5[%c0_9, %c0_10] : memref<1x128xf32, #tpu.memory_space<vmem>>, vector<1x128xf32>
    %11 = vector.broadcast %10 : vector<1x128xf32> to vector<512x128xf32>
    %12 = arith.addf %9, %11 : vector<512x128xf32>
    %c0_11 = arith.constant 0 : index
    %c0_12 = arith.constant 0 : index
    %13 = vector.load %arg6[%c0_11, %c0_12] : memref<512x128xf32, #tpu.memory_space<vmem>>, vector<512x128xf32>
    tpu.vector_store %arg6[%c0_11, %c0_12], %12 {strides = array<i32>} : memref<512x128xf32, #tpu.memory_space<vmem>>, vector<512x128xf32>,
    return
  }
  func.func @transform_0(%arg0: i32) -> (i32, i32) {
    %c0_i32 = arith.constant 0 : i32
    %c0_i32_0 = arith.constant 0 : i32
    return %arg0, %c0_i32 : i32, i32
  }
  func.func @transform_1(%arg0: i32) -> (i32, i32) {
    %c0_i32 = arith.constant 0 : i32
    %c0_i32_0 = arith.constant 0 : i32
    %c0_i32_1 = arith.constant 0 : i32
    return %c0_i32, %c0_i32_0 : i32, i32
  }
  func.func @transform_2(%arg0: i32) -> (i32, i32) {
    %c0_i32 = arith.constant 0 : i32
    %c0_i32_0 = arith.constant 0 : i32
    %c0_i32_1 = arith.constant 0 : i32
    return %c0_i32, %c0_i32_0 : i32, i32
  }
  func.func @transform_3(%arg0: i32) -> (i32, i32) {
    %c0_i32 = arith.constant 0 : i32
    %c0_i32_0 = arith.constant 0 : i32
    %c0_i32_1 = arith.constant 0 : i32
    return %c0_i32, %c0_i32_0 : i32, i32
  }
  func.func @transform_4(%arg0: i32) -> (i32, i32) {
    %c0_i32 = arith.constant 0 : i32
    %c0_i32_0 = arith.constant 0 : i32
    %c0_i32_1 = arith.constant 0 : i32
    return %c0_i32, %c0_i32_0 : i32, i32
  }
  func.func @transform_5(%arg0: i32) -> (i32, i32) {
    %c0_i32 = arith.constant 0 : i32
    %c0_i32_0 = arith.constant 0 : i32
    return %arg0, %c0_i32 : i32, i32
  }
}

</mosaic_0001>

<llo_original>
// kernel: aspp_forward.1
$region0: #{aspp_forward.1}
  #allocation0 [shape = 'u32[]', space=smem, size = 0x4, offset = 0x4, fixed_abs, tag = 'smem constant byte address 0x4 - core index']
  #allocation1 [shape = 'u32[144,128]{1,0:T(1,128)}', space=vmem, size = 0x12000, scoped, tag = 'internal scratch']
  %s0 = inlined_call_operand.vmem [shape: f32[512,128], index: 0, kind: input, shape index: {}]
  %s1 = inlined_call_operand.vmem [shape: f32[128,24], index: 1, kind: input, shape index: {}]
  %s2 = inlined_call_operand.vmem [shape: f32[1,24], index: 2, kind: input, shape index: {}]
  %s3 = inlined_call_operand.vmem [shape: f32[24,128], index: 3, kind: input, shape index: {}]
  %s4 = inlined_call_operand.vmem [shape: f32[1,128], index: 4, kind: input, shape index: {}]
  %s5 = inlined_call_operand.vmem [shape: f32[512,128], index: 5, kind: output, shape index: {}]
  %s6 = sld [smem:[#allocation0]]
  $region30: #{aspp_forward.1} parent=0
    _
  %s8 = ssub.s32 1, %s6
  %s9 = scalar_select 0, %s8, %s6
  // Predicated region
  $region2: #{aspp_forward.1} parent=0 // pred_check
    _
  $region3: #{aspp_forward.1} parent=0 // pred_check_branch
    %11 = sbr.rel (0) target = $region5
  $region4: #{aspp_forward.1} parent=0 // pred_region
    _
  $region5: #{aspp_forward.1} parent=0 // pred_fallthru
    _
  // Predicated region
  $region6: #{aspp_forward.1} parent=0 // pred_check
    _
  $region7: #{aspp_forward.1} parent=0 // pred_check_branch
    %13 = sbr.rel (0) target = $region9
  $region8: #{aspp_forward.1} parent=0 // pred_region
    _
  $region9: #{aspp_forward.1} parent=0 // pred_fallthru
    _
  // Predicated region
  $region10: #{aspp_forward.1} parent=0 // pred_check
    _
  $region11: #{aspp_forward.1} parent=0 // pred_check_branch
    %15 = sbr.rel (0) target = $region13
  $region12: #{aspp_forward.1} parent=0 // pred_region
    _
  $region13: #{aspp_forward.1} parent=0 // pred_fallthru
    _
  // Predicated region
  $region14: #{aspp_forward.1} parent=0 // pred_check
    _
  $region15: #{aspp_forward.1} parent=0 // pred_check_branch
    %17 = sbr.rel (0) target = $region17
  $region16: #{aspp_forward.1} parent=0 // pred_region
    _
  $region17: #{aspp_forward.1} parent=0 // pred_fallthru
    _
  // Predicated region
  $region18: #{aspp_forward.1} parent=0 // pred_check
    _
  $region19: #{aspp_forward.1} parent=0 // pred_check_branch
    %19 = sbr.rel (0) target = $region21
  $region20: #{aspp_forward.1} parent=0 // pred_region
    _
  $region21: #{aspp_forward.1} parent=0 // pred_fallthru
    _
  %v20 = vld [vmem:[%s0] sm:$0xff]
  %v21 = vld [vmem:[%s0 + $0x8] sm:$0xff]
  %v22 = vld [vmem:[%s0 + $0x10] sm:$0xff]
  %v23 = vld [vmem:[%s0 + $0x18] sm:$0xff]
  %v24 = vld [vmem:[%s0 + $0x20] sm:$0xff]
  %v25 = vld [vmem:[%s0 + $0x28] sm:$0xff]
  %v26 = vld [vmem:[%s0 + $0x30] sm:$0xff]
  %v27 = vld [vmem:[%s0 + $0x38] sm:$0xff]
  %v28 = vld [vmem:[%s0 + $0x40] sm:$0xff]
  %v29 = vld [vmem:[%s0 + $0x48] sm:$0xff]
  %v30 = vld [vmem:[%s0 + $0x50] sm:$0xff]
  %v31 = vld [vmem:[%s0 + $0x58] sm:$0xff]
  %v32 = vld [vmem:[%s0 + $0x60] sm:$0xff]
  %v33 = vld [vmem:[%s0 + $0x68] sm:$0xff]
  %v34 = vld [vmem:[%s0 + $0x70] sm:$0xff]
  %v35 = vld [vmem:[%s0 + $0x78] sm:$0xff]
  %v36 = vld [vmem:[%s0 + $0x80] sm:$0xff]
  %v37 = vld [vmem:[%s0 + $0x88] sm:$0xff]
  %v38 = vld [vmem:[%s0 + $0x90] sm:$0xff]
  %v39 = vld [vmem:[%s0 + $0x98] sm:$0xff]
  %v40 = vld [vmem:[%s0 + $0xa0] sm:$0xff]
  %v41 = vld [vmem:[%s0 + $0xa8] sm:$0xff]
  %v42 = vld [vmem:[%s0 + $0xb0] sm:$0xff]
  %v43 = vld [vmem:[%s0 + $0xb8] sm:$0xff]
  %v44 = vld [vmem:[%s0 + $0xc0] sm:$0xff]
  %v45 = vld [vmem:[%s0 + $0xc8] sm:$0xff]
  %v46 = vld [vmem:[%s0 + $0xd0] sm:$0xff]
  %v47 = vld [vmem:[%s0 + $0xd8] sm:$0xff]
  %v48 = vld [vmem:[%s0 + $0xe0] sm:$0xff]
  %v49 = vld [vmem:[%s0 + $0xe8] sm:$0xff]
  %v50 = vld [vmem:[%s0 + $0xf0] sm:$0xff]
  %v51 = vld [vmem:[%s0 + $0xf8] sm:$0xff]
  %v52 = vld [vmem:[%s0 + $0x100] sm:$0xff]
  %v53 = vld [vmem:[%s0 + $0x108] sm:$0xff]
  %v54 = vld [vmem:[%s0 + $0x110] sm:$0xff]
  %v55 = vld [vmem:[%s0 + $0x118] sm:$0xff]
  %v56 = vld [vmem:[%s0 + $0x120] sm:$0xff]
  %v57 = vld [vmem:[%s0 + $0x128] sm:$0xff]
  %v58 = vld [vmem:[%s0 + $0x130] sm:$0xff]
  %v59 = vld [vmem:[%s0 + $0x138] sm:$0xff]
  %v60 = vld [vmem:[%s0 + $0x140] sm:$0xff]
  %v61 = vld [vmem:[%s0 + $0x148] sm:$0xff]
  %v62 = vld [vmem:[%s0 + $0x150] sm:$0xff]
  %v63 = vld [vmem:[%s0 + $0x158] sm:$0xff]
  %v64 = vld [vmem:[%s0 + $0x160] sm:$0xff]
  %v65 = vld [vmem:[%s0 + $0x168] sm:$0xff]
  %v66 = vld [vmem:[%s0 + $0x170] sm:$0xff]
  %v67 = vld [vmem:[%s0 + $0x178] sm:$0xff]
  %v68 = vld [vmem:[%s0 + $0x180] sm:$0xff]
  %v69 = vld [vmem:[%s0 + $0x188] sm:$0xff]
  %v70 = vld [vmem:[%s0 + $0x190] sm:$0xff]
  %v71 = vld [vmem:[%s0 + $0x198] sm:$0xff]
  %v72 = vld [vmem:[%s0 + $0x1a0] sm:$0xff]
  %v73 = vld [vmem:[%s0 + $0x1a8] sm:$0xff]
  %v74 = vld [vmem:[%s0 + $0x1b0] sm:$0xff]
  %v75 = vld [vmem:[%s0 + $0x1b8] sm:$0xff]
  %v76 = vld [vmem:[%s0 + $0x1c0] sm:$0xff]
  %v77 = vld [vmem:[%s0 + $0x1c8] sm:$0xff]
  %v78 = vld [vmem:[%s0 + $0x1d0] sm:$0xff]
  %v79 = vld [vmem:[%s0 + $0x1d8] sm:$0xff]
  %v80 = vld [vmem:[%s0 + $0x1e0] sm:$0xff]
  %v81 = vld [vmem:[%s0 + $0x1e8] sm:$0xff]
  %v82 = vld [vmem:[%s0 + $0x1f0] sm:$0xff]
  %v83 = vld [vmem:[%s0 + $0x1f8] sm:$0xff]
  %v84 = vld [vmem:[%s1] sm:$0xff]
  %v85 = vld [vmem:[%s1 + $0x8] sm:$0xff]
  %v86 = vld [vmem:[%s1 + $0x10] sm:$0xff]
  %v87 = vld [vmem:[%s1 + $0x18] sm:$0xff]
  %v88 = vld [vmem:[%s1 + $0x20] sm:$0xff]
  %v89 = vld [vmem:[%s1 + $0x28] sm:$0xff]
  %v90 = vld [vmem:[%s1 + $0x30] sm:$0xff]
  %v91 = vld [vmem:[%s1 + $0x38] sm:$0xff]
  %v92 = vld [vmem:[%s1 + $0x40] sm:$0xff]
  %v93 = vld [vmem:[%s1 + $0x48] sm:$0xff]
  %v94 = vld [vmem:[%s1 + $0x50] sm:$0xff]
  %v95 = vld [vmem:[%s1 + $0x58] sm:$0xff]
  %v96 = vld [vmem:[%s1 + $0x60] sm:$0xff]
  %v97 = vld [vmem:[%s1 + $0x68] sm:$0xff]
  %v98 = vld [vmem:[%s1 + $0x70] sm:$0xff]
  %v99 = vld [vmem:[%s1 + $0x78] sm:$0xff]
  %v100 = vld [vmem:[%s2] sm:$0x1]
  %v102 = vlaneseq
  %v103 = vshrl.u32 %v102, 7
  %v104 = vsub.s32 0, %v103
  %v105 = vrot.slane %v100, %v104
  %107 = vmatprep.subr.mxu0 0.0
  %108 = vmatpush1.msra.mxu0 %v84
  %109 = vmatprep.subr.mxu0 0.0
  %110 = vmatpush1.msra.mxu0 %v85
  %111 = vmatprep.subr.mxu0 0.0
  %112 = vmatpush1.msra.mxu0 %v86
  %113 = vmatprep.subr.mxu0 0.0
  %114 = vmatpush1.msra.mxu0 %v87
  %115 = vmatprep.subr.mxu0 0.0
  %116 = vmatpush1.msra.mxu0 %v88
  %117 = vmatprep.subr.mxu0 0.0
  %118 = vmatpush1.msra.mxu0 %v89
  %119 = vmatprep.subr.mxu0 0.0
  %120 = vmatpush1.msra.mxu0 %v90
  %121 = vmatprep.subr.mxu0 0.0
  %122 = vmatpush1.msra.mxu0 %v91
  %123 = vmatprep.subr.mxu0 0.0
  %124 = vmatpush1.msra.mxu0 %v92
  %125 = vmatprep.subr.mxu0 0.0
  %126 = vmatpush1.msra.mxu0 %v93
  %127 = vmatprep.subr.mxu0 0.0
  %128 = vmatpush1.msra.mxu0 %v94
  %129 = vmatprep.subr.mxu0 0.0
  %130 = vmatpush1.msra.mxu0 %v95
  %131 = vmatprep.subr.mxu0 0.0
  %132 = vmatpush1.msra.mxu0 %v96
  %133 = vmatprep.subr.mxu0 0.0
  %134 = vmatpush1.msra.mxu0 %v97
  %135 = vmatprep.subr.mxu0 0.0
  %136 = vmatpush1.msra.mxu0 %v98
  %137 = vmatprep.subr.mxu0 0.0
  %138 = vmatpush1.msra.mxu0 %v99
  %139 = vmatprep.subr.mxu0 0.0
  %140 = vmatpush1.msra.mxu0 0.0
  %141 = vmatprep.subr.mxu0 0.0
  %142 = vmatpush1.msra.mxu0 0.0
  %143 = vmatprep.subr.mxu0 0.0
  %144 = vmatpush1.msra.mxu0 0.0
  %145 = vmatprep.subr.mxu0 0.0
  %146 = vmatpush1.msra.mxu0 0.0
  %147 = vmatprep.subr.mxu0 0.0
  %148 = vmatpush1.msra.mxu0 0.0
  %149 = vmatprep.subr.mxu0 0.0
  %150 = vmatpush1.msra.mxu0 0.0
  %151 = vmatprep.subr.mxu0 0.0
  %152 = vmatpush1.msra.mxu0 0.0
  %153 = vmatprep.subr.mxu0 0.0
  %154 = vmatpush1.msra.mxu0 0.0
  %155 = vmatprep.subr.mxu0 0.0
  %156 = vmatpush1.msra.mxu0 0.0
  %157 = vmatprep.subr.mxu0 0.0
  %158 = vmatpush1.msra.mxu0 0.0
  %159 = vmatprep.subr.mxu0 0.0
  %160 = vmatpush1.msra.mxu0 0.0
  %161 = vmatprep.subr.mxu0 0.0
  %162 = vmatpush1.msra.mxu0 0.0
  %163 = vmatprep.subr.mxu0 0.0
  %164 = vmatpush1.msra.mxu0 0.0
  %165 = vmatprep.subr.mxu0 0.0
  %166 = vmatpush1.msra.mxu0 0.0
  %167 = vmatprep.subr.mxu0 0.0
  %168 = vmatpush1.msra.mxu0 0.0
  %169 = vmatprep.subr.mxu0 0.0
  %170 = vmatpush1.msra.mxu0 0.0
  %171 = vmatprep.mubr.f32.mxu0 0.0
  %172 = vmatmul.mubr.f32.gmra.mrb[0].mxu0 %v20
  %v173 = vpop.f32.mrb[0].mxu0
  %v174 = vadd.f32 %v105, %v173
  %v175 = vpop.f32.mrb[0].mxu0
  %176 = vmatprep.mubr.f32.mxu0 0.0
  %177 = vmatmul.mubr.f32.gmra.mrb[0].mxu0 %v21
  %v178 = vpop.f32.mrb[0].mxu0
  %v179 = vadd.f32 %v105, %v178
  %v180 = vpop.f32.mrb[0].mxu0
  %181 = vmatprep.mubr.f32.mxu0 0.0
  %182 = vmatmul.mubr.f32.gmra.mrb[0].mxu0 %v22
  %v183 = vpop.f32.mrb[0].mxu0
  %v184 = vadd.f32 %v105, %v183
  %v185 = vpop.f32.mrb[0].mxu0
  %186 = vmatprep.mubr.f32.mxu0 0.0
  %187 = vmatmul.mubr.f32.gmra.mrb[0].mxu0 %v23
  %v188 = vpop.f32.mrb[0].mxu0
  %v189 = vadd.f32 %v105, %v188
  %v190 = vpop.f32.mrb[0].mxu0
  %191 = vmatprep.mubr.f32.mxu0 0.0
  %192 = vmatmul.mubr.f32.gmra.mrb[0].mxu0 %v24
  %v193 = vpop.f32.mrb[0].mxu0
  %v194 = vadd.f32 %v105, %v193
  %v195 = vpop.f32.mrb[0].mxu0
  %196 = vmatprep.mubr.f32.mxu0 0.0
  %197 = vmatmul.mubr.f32.gmra.mrb[0].mxu0 %v25
  %v198 = vpop.f32.mrb[0].mxu0
  %v199 = vadd.f32 %v105, %v198
  %v200 = vpop.f32.mrb[0].mxu0
  %201 = vmatprep.mubr.f32.mxu0 0.0
  %202 = vmatmul.mubr.f32.gmra.mrb[0].mxu0 %v26
  %v203 = vpop.f32.mrb[0].mxu0
  %v204 = vadd.f32 %v105, %v203
  %v205 = vpop.f32.mrb[0].mxu0
  %206 = vmatprep.mubr.f32.mxu0 0.0
  %207 = vmatmul.mubr.f32.gmra.mrb[0].mxu0 %v27
  %v208 = vpop.f32.mrb[0].mxu0
  %v209 = vadd.f32 %v105, %v208
  %v210 = vpop.f32.mrb[0].mxu0
  %211 = vmatprep.mubr.f32.mxu0 0.0
  %212 = vmatmul.mubr.f32.gmra.mrb[0].mxu0 %v28
  %v213 = vpop.f32.mrb[0].mxu0
  %v214 = vadd.f32 %v105, %v213
  %v215 = vpop.f32.mrb[0].mxu0
  %216 = vmatprep.mubr.f32.mxu0 0.0
  %217 = vmatmul.mubr.f32.gmra.mrb[0].mxu0 %v29
  %v218 = vpop.f32.mrb[0].mxu0
  %v219 = vadd.f32 %v105, %v218
  %v220 = vpop.f32.mrb[0].mxu0
  %221 = vmatprep.mubr.f32.mxu0 0.0
  %222 = vmatmul.mubr.f32.gmra.mrb[0].mxu0 %v30
  %v223 = vpop.f32.mrb[0].mxu0
  %v224 = vadd.f32 %v105, %v223
  %v225 = vpop.f32.mrb[0].mxu0
  %226 = vmatprep.mubr.f32.mxu0 0.0
  %227 = vmatmul.mubr.f32.gmra.mrb[0].mxu0 %v31
  %v228 = vpop.f32.mrb[0].mxu0
  %v229 = vadd.f32 %v105, %v228
  %v230 = vpop.f32.mrb[0].mxu0
  %231 = vmatprep.mubr.f32.mxu0 0.0
  %232 = vmatmul.mubr.f32.gmra.mrb[0].mxu0 %v32
  %v233 = vpop.f32.mrb[0].mxu0
  %v234 = vadd.f32 %v105, %v233
  %v235 = vpop.f32.mrb[0].mxu0
  %236 = vmatprep.mubr.f32.mxu0 0.0
  %237 = vmatmul.mubr.f32.gmra.mrb[0].mxu0 %v33
  %v238 = vpop.f32.mrb[0].mxu0
  %v239 = vadd.f32 %v105, %v238
  %v240 = vpop.f32.mrb[0].mxu0
  %241 = vmatprep.mubr.f32.mxu0 0.0
  %242 = vmatmul.mubr.f32.gmra.mrb[0].mxu0 %v34
  %v243 = vpop.f32.mrb[0].mxu0
  %v244 = vadd.f32 %v105, %v243
  %v245 = vpop.f32.mrb[0].mxu0
  %246 = vmatprep.mubr.f32.mxu0 0.0
  %247 = vmatmul.mubr.f32.gmra.mrb[0].mxu0 %v35
  %v248 = vpop.f32.mrb[0].mxu0
  %v249 = vadd.f32 %v105, %v248
  %v250 = vpop.f32.mrb[0].mxu0
  %251 = vmatprep.mubr.f32.mxu0 0.0
  %252 = vmatmul.mubr.f32.gmra.mrb[0].mxu0 %v36
  %v253 = vpop.f32.mrb[0].mxu0
  %v254 = vadd.f32 %v105, %v253
  %v255 = vpop.f32.mrb[0].mxu0
  %256 = vmatprep.mubr.f32.mxu0 0.0
  %257 = vmatmul.mubr.f32.gmra.mrb[0].mxu0 %v37
  %v258 = vpop.f32.mrb[0].mxu0
  %v259 = vadd.f32 %v105, %v258
  %v260 = vpop.f32.mrb[0].mxu0
  %261 = vmatprep.mubr.f32.mxu0 0.0
  %262 = vmatmul.mubr.f32.gmra.mrb[0].mxu0 %v38
  %v263 = vpop.f32.mrb[0].mxu0
  %v264 = vadd.f32 %v105, %v263
  %v265 = vpop.f32.mrb[0].mxu0
  %266 = vmatprep.mubr.f32.mxu0 0.0
  %267 = vmatmul.mubr.f32.gmra.mrb[0].mxu0 %v39
  %v268 = vpop.f32.mrb[0].mxu0
  %v269 = vadd.f32 %v105, %v268
  %v270 = vpop.f32.mrb[0].mxu0
  %271 = vmatprep.mubr.f32.mxu0 0.0
  %272 = vmatmul.mubr.f32.gmra.mrb[0].mxu0 %v40
  %v273 = vpop.f32.mrb[0].mxu0
  %v274 = vadd.f32 %v105, %v273
  %v275 = vpop.f32.mrb[0].mxu0
  %276 = vmatprep.mubr.f32.mxu0 0.0
  %277 = vmatmul.mubr.f32.gmra.mrb[0].mxu0 %v41
  %v278 = vpop.f32.mrb[0].mxu0
  %v279 = vadd.f32 %v105, %v278
  %v280 = vpop.f32.mrb[0].mxu0
  %281 = vmatprep.mubr.f32.mxu0 0.0
  %282 = vmatmul.mubr.f32.gmra.mrb[0].mxu0 %v42
  %v283 = vpop.f32.mrb[0].mxu0
  %v284 = vadd.f32 %v105, %v283
  %v285 = vpop.f32.mrb[0].mxu0
  %286 = vmatprep.mubr.f32.mxu0 0.0
  %287 = vmatmul.mubr.f32.gmra.mrb[0].mxu0 %v43
  %v288 = vpop.f32.mrb[0].mxu0
  %v289 = vadd.f32 %v105, %v288
  %v290 = vpop.f32.mrb[0].mxu0
  %291 = vmatprep.mubr.f32.mxu0 0.0
  %292 = vmatmul.mubr.f32.gmra.mrb[0].mxu0 %v44
  %v293 = vpop.f32.mrb[0].mxu0
  %v294 = vadd.f32 %v105, %v293
  %v295 = vpop.f32.mrb[0].mxu0
  %296 = vmatprep.mubr.f32.mxu0 0.0
  %297 = vmatmul.mubr.f32.gmra.mrb[0].mxu0 %v45
  %v298 = vpop.f32.mrb[0].mxu0
  %v299 = vadd.f32 %v105, %v298
  %v300 = vpop.f32.mrb[0].mxu0
  %301 = vmatprep.mubr.f32.mxu0 0.0
  %302 = vmatmul.mubr.f32.gmra.mrb[0].mxu0 %v46
  %v303 = vpop.f32.mrb[0].mxu0
  %v304 = vadd.f32 %v105, %v303
  %v305 = vpop.f32.mrb[0].mxu0
  %306 = vmatprep.mubr.f32.mxu0 0.0
  %307 = vmatmul.mubr.f32.gmra.mrb[0].mxu0 %v47
  %v308 = vpop.f32.mrb[0].mxu0
  %v309 = vadd.f32 %v105, %v308
  %v310 = vpop.f32.mrb[0].mxu0
  %311 = vmatprep.mubr.f32.mxu0 0.0
  %312 = vmatmul.mubr.f32.gmra.mrb[0].mxu0 %v48
  %v313 = vpop.f32.mrb[0].mxu0
  %v314 = vadd.f32 %v105, %v313
  %v315 = vpop.f32.mrb[0].mxu0
  %316 = vmatprep.mubr.f32.mxu0 0.0
  %317 = vmatmul.mubr.f32.gmra.mrb[0].mxu0 %v49
  %v318 = vpop.f32.mrb[0].mxu0
  %v319 = vadd.f32 %v105, %v318
  %v320 = vpop.f32.mrb[0].mxu0
  %321 = vmatprep.mubr.f32.mxu0 0.0
  %322 = vmatmul.mubr.f32.gmra.mrb[0].mxu0 %v50
  %v323 = vpop.f32.mrb[0].mxu0
  %v324 = vadd.f32 %v105, %v323
  %v325 = vpop.f32.mrb[0].mxu0
  %326 = vmatprep.mubr.f32.mxu0 0.0
  %327 = vmatmul.mubr.f32.gmra.mrb[0].mxu0 %v51
  %v328 = vpop.f32.mrb[0].mxu0
  %v329 = vadd.f32 %v105, %v328
  %v330 = vpop.f32.mrb[0].mxu0
  %331 = vmatprep.mubr.f32.mxu0 0.0
  %332 = vmatmul.mubr.f32.gmra.mrb[0].mxu0 %v52
  %v333 = vpop.f32.mrb[0].mxu0
  %v334 = vadd.f32 %v105, %v333
  %v335 = vpop.f32.mrb[0].mxu0
  %336 = vmatprep.mubr.f32.mxu0 0.0
  %337 = vmatmul.mubr.f32.gmra.mrb[0].mxu0 %v53
  %v338 = vpop.f32.mrb[0].mxu0
  %v339 = vadd.f32 %v105, %v338
  %v340 = vpop.f32.mrb[0].mxu0
  %341 = vmatprep.mubr.f32.mxu0 0.0
  %342 = vmatmul.mubr.f32.gmra.mrb[0].mxu0 %v54
  %v343 = vpop.f32.mrb[0].mxu0
  %v344 = vadd.f32 %v105, %v343
  %v345 = vpop.f32.mrb[0].mxu0
  %346 = vmatprep.mubr.f32.mxu0 0.0
  %347 = vmatmul.mubr.f32.gmra.mrb[0].mxu0 %v55
  %v348 = vpop.f32.mrb[0].mxu0
  %v349 = vadd.f32 %v105, %v348
  %v350 = vpop.f32.mrb[0].mxu0
  %351 = vmatprep.mubr.f32.mxu0 0.0
  %352 = vmatmul.mubr.f32.gmra.mrb[0].mxu0 %v56
  %v353 = vpop.f32.mrb[0].mxu0
  %v354 = vadd.f32 %v105, %v353
  %v355 = vpop.f32.mrb[0].mxu0
  %356 = vmatprep.mubr.f32.mxu0 0.0
  %357 = vmatmul.mubr.f32.gmra.mrb[0].mxu0 %v57
  %v358 = vpop.f32.mrb[0].mxu0
  %v359 = vadd.f32 %v105, %v358
  %v360 = vpop.f32.mrb[0].mxu0
  %361 = vmatprep.mubr.f32.mxu0 0.0
  %362 = vmatmul.mubr.f32.gmra.mrb[0].mxu0 %v58
  %v363 = vpop.f32.mrb[0].mxu0
  %v364 = vadd.f32 %v105, %v363
  %v365 = vpop.f32.mrb[0].mxu0
  %366 = vmatprep.mubr.f32.mxu0 0.0
  %367 = vmatmul.mubr.f32.gmra.mrb[0].mxu0 %v59
  %v368 = vpop.f32.mrb[0].mxu0
  %v369 = vadd.f32 %v105, %v368
  %v370 = vpop.f32.mrb[0].mxu0
  %371 = vmatprep.mubr.f32.mxu0 0.0
  %372 = vmatmul.mubr.f32.gmra.mrb[0].mxu0 %v60
  %v373 = vpop.f32.mrb[0].mxu0
  %v374 = vadd.f32 %v105, %v373
  %v375 = vpop.f32.mrb[0].mxu0
  %376 = vmatprep.mubr.f32.mxu0 0.0
  %377 = vmatmul.mubr.f32.gmra.mrb[0].mxu0 %v61
  %v378 = vpop.f32.mrb[0].mxu0
  %v379 = vadd.f32 %v105, %v378
  %v380 = vpop.f32.mrb[0].mxu0
  %381 = vmatprep.mubr.f32.mxu0 0.0
  %382 = vmatmul.mubr.f32.gmra.mrb[0].mxu0 %v62
  %v383 = vpop.f32.mrb[0].mxu0
  %v384 = vadd.f32 %v105, %v383
  %v385 = vpop.f32.mrb[0].mxu0
  %386 = vmatprep.mubr.f32.mxu0 0.0
  %387 = vmatmul.mubr.f32.gmra.mrb[0].mxu0 %v63
  %v388 = vpop.f32.mrb[0].mxu0
  %v389 = vadd.f32 %v105, %v388
  %v390 = vpop.f32.mrb[0].mxu0
  %391 = vmatprep.mubr.f32.mxu0 0.0
  %392 = vmatmul.mubr.f32.gmra.mrb[0].mxu0 %v64
  %v393 = vpop.f32.mrb[0].mxu0
  %v394 = vadd.f32 %v105, %v393
  %v395 = vpop.f32.mrb[0].mxu0
  %396 = vmatprep.mubr.f32.mxu0 0.0
  %397 = vmatmul.mubr.f32.gmra.mrb[0].mxu0 %v65
  %v398 = vpop.f32.mrb[0].mxu0
  %v399 = vadd.f32 %v105, %v398
  %v400 = vpop.f32.mrb[0].mxu0
  %401 = vmatprep.mubr.f32.mxu0 0.0
  %402 = vmatmul.mubr.f32.gmra.mrb[0].mxu0 %v66
  %v403 = vpop.f32.mrb[0].mxu0
  %v404 = vadd.f32 %v105, %v403
  %v405 = vpop.f32.mrb[0].mxu0
  %406 = vmatprep.mubr.f32.mxu0 0.0
  %407 = vmatmul.mubr.f32.gmra.mrb[0].mxu0 %v67
  %v408 = vpop.f32.mrb[0].mxu0
  %v409 = vadd.f32 %v105, %v408
  %v410 = vpop.f32.mrb[0].mxu0
  %411 = vmatprep.mubr.f32.mxu0 0.0
  %412 = vmatmul.mubr.f32.gmra.mrb[0].mxu0 %v68
  %v413 = vpop.f32.mrb[0].mxu0
  %v414 = vadd.f32 %v105, %v413
  %v415 = vpop.f32.mrb[0].mxu0
  %416 = vmatprep.mubr.f32.mxu0 0.0
  %417 = vmatmul.mubr.f32.gmra.mrb[0].mxu0 %v69
  %v418 = vpop.f32.mrb[0].mxu0
  %v419 = vadd.f32 %v105, %v418
  %v420 = vpop.f32.mrb[0].mxu0
  %421 = vmatprep.mubr.f32.mxu0 0.0
  %422 = vmatmul.mubr.f32.gmra.mrb[0].mxu0 %v70
  %v423 = vpop.f32.mrb[0].mxu0
  %v424 = vadd.f32 %v105, %v423
  %v425 = vpop.f32.mrb[0].mxu0
  %426 = vmatprep.mubr.f32.mxu0 0.0
  %427 = vmatmul.mubr.f32.gmra.mrb[0].mxu0 %v71
  %v428 = vpop.f32.mrb[0].mxu0
  %v429 = vadd.f32 %v105, %v428
  %v430 = vpop.f32.mrb[0].mxu0
  %431 = vmatprep.mubr.f32.mxu0 0.0
  %432 = vmatmul.mubr.f32.gmra.mrb[0].mxu0 %v72
  %v433 = vpop.f32.mrb[0].mxu0
  %v434 = vadd.f32 %v105, %v433
  %v435 = vpop.f32.mrb[0].mxu0
  %436 = vmatprep.mubr.f32.mxu0 0.0
  %437 = vmatmul.mubr.f32.gmra.mrb[0].mxu0 %v73
  %v438 = vpop.f32.mrb[0].mxu0
  %v439 = vadd.f32 %v105, %v438
  %v440 = vpop.f32.mrb[0].mxu0
  %441 = vmatprep.mubr.f32.mxu0 0.0
  %442 = vmatmul.mubr.f32.gmra.mrb[0].mxu0 %v74
  %v443 = vpop.f32.mrb[0].mxu0
  %v444 = vadd.f32 %v105, %v443
  %v445 = vpop.f32.mrb[0].mxu0
  %446 = vmatprep.mubr.f32.mxu0 0.0
  %447 = vmatmul.mubr.f32.gmra.mrb[0].mxu0 %v75
  %v448 = vpop.f32.mrb[0].mxu0
  %v449 = vadd.f32 %v105, %v448
  %v450 = vpop.f32.mrb[0].mxu0
  %451 = vmatprep.mubr.f32.mxu0 0.0
  %452 = vmatmul.mubr.f32.gmra.mrb[0].mxu0 %v76
  %v453 = vpop.f32.mrb[0].mxu0
  %v454 = vadd.f32 %v105, %v453
  %v455 = vpop.f32.mrb[0].mxu0
  %456 = vmatprep.mubr.f32.mxu0 0.0
  %457 = vmatmul.mubr.f32.gmra.mrb[0].mxu0 %v77
  %v458 = vpop.f32.mrb[0].mxu0
  %v459 = vadd.f32 %v105, %v458
  %v460 = vpop.f32.mrb[0].mxu0
  %461 = vmatprep.mubr.f32.mxu0 0.0
  %462 = vmatmul.mubr.f32.gmra.mrb[0].mxu0 %v78
  %v463 = vpop.f32.mrb[0].mxu0
  %v464 = vadd.f32 %v105, %v463
  %v465 = vpop.f32.mrb[0].mxu0
  %466 = vmatprep.mubr.f32.mxu0 0.0
  %467 = vmatmul.mubr.f32.gmra.mrb[0].mxu0 %v79
  %v468 = vpop.f32.mrb[0].mxu0
  %v469 = vadd.f32 %v105, %v468
  %v470 = vpop.f32.mrb[0].mxu0
  %471 = vmatprep.mubr.f32.mxu0 0.0
  %472 = vmatmul.mubr.f32.gmra.mrb[0].mxu0 %v80
  %v473 = vpop.f32.mrb[0].mxu0
  %v474 = vadd.f32 %v105, %v473
  %v475 = vpop.f32.mrb[0].mxu0
  %476 = vmatprep.mubr.f32.mxu0 0.0
  %477 = vmatmul.mubr.f32.gmra.mrb[0].mxu0 %v81
  %v478 = vpop.f32.mrb[0].mxu0
  %v479 = vadd.f32 %v105, %v478
  %v480 = vpop.f32.mrb[0].mxu0
  %481 = vmatprep.mubr.f32.mxu0 0.0
  %482 = vmatmul.mubr.f32.gmra.mrb[0].mxu0 %v82
  %v483 = vpop.f32.mrb[0].mxu0
  %v484 = vadd.f32 %v105, %v483
  %v485 = vpop.f32.mrb[0].mxu0
  %486 = vmatprep.mubr.f32.mxu0 0.0
  %487 = vmatmul.mubr.f32.gmra.mrb[0].mxu0 %v83
  %v488 = vpop.f32.mrb[0].mxu0
  %v489 = vadd.f32 %v105, %v488
  %v490 = vpop.f32.mrb[0].mxu0
  %491 = vdwg.mxu0
  %v492 = vmax.f32 %v174, 0.0
  %v493 = vmax.f32 %v179, 0.0
  %v494 = vmax.f32 %v184, 0.0
  %v495 = vmax.f32 %v189, 0.0
  %v496 = vmax.f32 %v194, 0.0
  %v497 = vmax.f32 %v199, 0.0
  %v498 = vmax.f32 %v204, 0.0
  %v499 = vmax.f32 %v209, 0.0
  %v500 = vmax.f32 %v214, 0.0
  %v501 = vmax.f32 %v219, 0.0
  %v502 = vmax.f32 %v224, 0.0
  %v503 = vmax.f32 %v229, 0.0
  %v504 = vmax.f32 %v234, 0.0
  %v505 = vmax.f32 %v239, 0.0
  %v506 = vmax.f32 %v244, 0.0
  %v507 = vmax.f32 %v249, 0.0
  %v508 = vmax.f32 %v254, 0.0
  %v509 = vmax.f32 %v259, 0.0
  %v510 = vmax.f32 %v264, 0.0
  %v511 = vmax.f32 %v269, 0.0
  %v512 = vmax.f32 %v274, 0.0
  %v513 = vmax.f32 %v279, 0.0
  %v514 = vmax.f32 %v284, 0.0
  %v515 = vmax.f32 %v289, 0.0
  %v516 = vmax.f32 %v294, 0.0
  %v517 = vmax.f32 %v299, 0.0
  %v518 = vmax.f32 %v304, 0.0
  %v519 = vmax.f32 %v309, 0.0
  %v520 = vmax.f32 %v314, 0.0
  %v521 = vmax.f32 %v319, 0.0
  %v522 = vmax.f32 %v324, 0.0
  %v523 = vmax.f32 %v329, 0.0
  %v524 = vmax.f32 %v334, 0.0
  %v525 = vmax.f32 %v339, 0.0
  %v526 = vmax.f32 %v344, 0.0
  %v527 = vmax.f32 %v349, 0.0
  %v528 = vmax.f32 %v354, 0.0
  %v529 = vmax.f32 %v359, 0.0
  %v530 = vmax.f32 %v364, 0.0
  %v531 = vmax.f32 %v369, 0.0
  %v532 = vmax.f32 %v374, 0.0
  %v533 = vmax.f32 %v379, 0.0
  %v534 = vmax.f32 %v384, 0.0
  %v535 = vmax.f32 %v389, 0.0
  %v536 = vmax.f32 %v394, 0.0
  %v537 = vmax.f32 %v399, 0.0
  %v538 = vmax.f32 %v404, 0.0
  %v539 = vmax.f32 %v409, 0.0
  %v540 = vmax.f32 %v414, 0.0
  %v541 = vmax.f32 %v419, 0.0
  %v542 = vmax.f32 %v424, 0.0
  %v543 = vmax.f32 %v429, 0.0
  %v544 = vmax.f32 %v434, 0.0
  %v545 = vmax.f32 %v439, 0.0
  %v546 = vmax.f32 %v444, 0.0
  %v547 = vmax.f32 %v449, 0.0
  %v548 = vmax.f32 %v454, 0.0
  %v549 = vmax.f32 %v459, 0.0
  %v550 = vmax.f32 %v464, 0.0
  %v551 = vmax.f32 %v469, 0.0
  %v552 = vmax.f32 %v474, 0.0
  %v553 = vmax.f32 %v479, 0.0
  %v554 = vmax.f32 %v484, 0.0
  %v555 = vmax.f32 %v489, 0.0
  %v556 = vld [vmem:[%s3] sm:$0xff]
  %v557 = vld [vmem:[%s3 + $0x8] sm:$0xff]
  %v558 = vld [vmem:[%s3 + $0x10] sm:$0xff]
  %v559 = vld [vmem:[%s4] sm:$0x1]
  %v561 = vlaneseq
  %v562 = vshrl.u32 %v561, 7
  %v563 = vsub.s32 0, %v562
  %v564 = vrot.slane %v559, %v563
  %vm566 = vcmask 195584
  %v568 = vsel %vm566, %v492, 0
  %v571 = vsel %vm566, %v493, 0
  %v574 = vsel %vm566, %v494, 0
  %v577 = vsel %vm566, %v495, 0
  %v580 = vsel %vm566, %v496, 0
  %v583 = vsel %vm566, %v497, 0
  %v586 = vsel %vm566, %v498, 0
  %v589 = vsel %vm566, %v499, 0
  %v592 = vsel %vm566, %v500, 0
  %v595 = vsel %vm566, %v501, 0
  %v598 = vsel %vm566, %v502, 0
  %v601 = vsel %vm566, %v503, 0
  %v604 = vsel %vm566, %v504, 0
  %v607 = vsel %vm566, %v505, 0
  %v610 = vsel %vm566, %v506, 0
  %v613 = vsel %vm566, %v507, 0
  %v616 = vsel %vm566, %v508, 0
  %v619 = vsel %vm566, %v509, 0
  %v622 = vsel %vm566, %v510, 0
  %v625 = vsel %vm566, %v511, 0
  %v628 = vsel %vm566, %v512, 0
  %v631 = vsel %vm566, %v513, 0
  %v634 = vsel %vm566, %v514, 0
  %v637 = vsel %vm566, %v515, 0
  %v640 = vsel %vm566, %v516, 0
  %v643 = vsel %vm566, %v517, 0
  %v646 = vsel %vm566, %v518, 0
  %v649 = vsel %vm566, %v519, 0
  %v652 = vsel %vm566, %v520, 0
  %v655 = vsel %vm566, %v521, 0
  %v658 = vsel %vm566, %v522, 0
  %v661 = vsel %vm566, %v523, 0
  %v664 = vsel %vm566, %v524, 0
  %v667 = vsel %vm566, %v525, 0
  %v670 = vsel %vm566, %v526, 0
  %v673 = vsel %vm566, %v527, 0
  %v676 = vsel %vm566, %v528, 0
  %v679 = vsel %vm566, %v529, 0
  %v682 = vsel %vm566, %v530, 0
  %v685 = vsel %vm566, %v531, 0
  %v688 = vsel %vm566, %v532, 0
  %v691 = vsel %vm566, %v533, 0
  %v694 = vsel %vm566, %v534, 0
  %v697 = vsel %vm566, %v535, 0
  %v700 = vsel %vm566, %v536, 0
  %v703 = vsel %vm566, %v537, 0
  %v706 = vsel %vm566, %v538, 0
  %v709 = vsel %vm566, %v539, 0
  %v712 = vsel %vm566, %v540, 0
  %v715 = vsel %vm566, %v541, 0
  %v718 = vsel %vm566, %v542, 0
  %v721 = vsel %vm566, %v543, 0
  %v724 = vsel %vm566, %v544, 0
  %v727 = vsel %vm566, %v545, 0
  %v730 = vsel %vm566, %v546, 0
  %v733 = vsel %vm566, %v547, 0
  %v736 = vsel %vm566, %v548, 0
  %v739 = vsel %vm566, %v549, 0
  %v742 = vsel %vm566, %v550, 0
  %v745 = vsel %vm566, %v551, 0
  %v748 = vsel %vm566, %v552, 0
  %v751 = vsel %vm566, %v553, 0
  %v754 = vsel %vm566, %v554, 0
  %v757 = vsel %vm566, %v555, 0
  %759 = vmatprep.subr.mxu0 0.0
  %760 = vmatpush1.msra.mxu0 %v556
  %761 = vmatprep.subr.mxu0 0.0
  %762 = vmatpush1.msra.mxu0 %v557
  %763 = vmatprep.subr.mxu0 0.0
  %764 = vmatpush1.msra.mxu0 %v558
  %765 = vmatprep.subr.mxu0 0.0
  %766 = vmatpush1.msra.mxu0 0.0
  %767 = vmatprep.subr.mxu0 0.0
  %768 = vmatpush1.msra.mxu0 0.0
  %769 = vmatprep.subr.mxu0 0.0
  %770 = vmatpush1.msra.mxu0 0.0
  %771 = vmatprep.subr.mxu0 0.0
  %772 = vmatpush1.msra.mxu0 0.0
  %773 = vmatprep.subr.mxu0 0.0
  %774 = vmatpush1.msra.mxu0 0.0
  %775 = vmatprep.subr.mxu0 0.0
  %776 = vmatpush1.msra.mxu0 0.0
  %777 = vmatprep.subr.mxu0 0.0
  %778 = vmatpush1.msra.mxu0 0.0
  %779 = vmatprep.subr.mxu0 0.0
  %780 = vmatpush1.msra.mxu0 0.0
  %781 = vmatprep.subr.mxu0 0.0
  %782 = vmatpush1.msra.mxu0 0.0
  %783 = vmatprep.subr.mxu0 0.0
  %784 = vmatpush1.msra.mxu0 0.0
  %785 = vmatprep.subr.mxu0 0.0
  %786 = vmatpush1.msra.mxu0 0.0
  %787 = vmatprep.subr.mxu0 0.0
  %788 = vmatpush1.msra.mxu0 0.0
  %789 = vmatprep.subr.mxu0 0.0
  %790 = vmatpush1.msra.mxu0 0.0
  %791 = vmatprep.subr.mxu0 0.0
  %792 = vmatpush1.msra.mxu0 0.0
  %793 = vmatprep.subr.mxu0 0.0
  %794 = vmatpush1.msra.mxu0 0.0
  %795 = vmatprep.subr.mxu0 0.0
  %796 = vmatpush1.msra.mxu0 0.0
  %797 = vmatprep.subr.mxu0 0.0
  %798 = vmatpush1.msra.mxu0 0.0
  %799 = vmatprep.subr.mxu0 0.0
  %800 = vmatpush1.msra.mxu0 0.0
  %801 = vmatprep.subr.mxu0 0.0
  %802 = vmatpush1.msra.mxu0 0.0
  %803 = vmatprep.subr.mxu0 0.0
  %804 = vmatpush1.msra.mxu0 0.0
  %805 = vmatprep.subr.mxu0 0.0
  %806 = vmatpush1.msra.mxu0 0.0
  %807 = vmatprep.subr.mxu0 0.0
  %808 = vmatpush1.msra.mxu0 0.0
  %809 = vmatprep.subr.mxu0 0.0
  %810 = vmatpush1.msra.mxu0 0.0
  %811 = vmatprep.subr.mxu0 0.0
  %812 = vmatpush1.msra.mxu0 0.0
  %813 = vmatprep.subr.mxu0 0.0
  %814 = vmatpush1.msra.mxu0 0.0
  %815 = vmatprep.subr.mxu0 0.0
  %816 = vmatpush1.msra.mxu0 0.0
  %817 = vmatprep.subr.mxu0 0.0
  %818 = vmatpush1.msra.mxu0 0.0
  %819 = vmatprep.subr.mxu0 0.0
  %820 = vmatpush1.msra.mxu0 0.0
  %821 = vmatprep.subr.mxu0 0.0
  %822 = vmatpush1.msra.mxu0 0.0
  %823 = vmatprep.mubr.f32.mxu0 0.0
  %824 = vmatmul.mubr.f32.gmra.mrb[0].mxu0 %v568
  %v825 = vpop.f32.mrb[0].mxu0
  %v826 = vadd.f32 %v564, %v825
  %v827 = vpop.f32.mrb[0].mxu0
  %828 = vmatprep.mubr.f32.mxu0 0.0
  %829 = vmatmul.mubr.f32.gmra.mrb[0].mxu0 %v571
  %v830 = vpop.f32.mrb[0].mxu0
  %v831 = vadd.f32 %v564, %v830
  %v832 = vpop.f32.mrb[0].mxu0
  %833 = vmatprep.mubr.f32.mxu0 0.0
  %834 = vmatmul.mubr.f32.gmra.mrb[0].mxu0 %v574
  %v835 = vpop.f32.mrb[0].mxu0
  %v836 = vadd.f32 %v564, %v835
  %v837 = vpop.f32.mrb[0].mxu0
  %838 = vmatprep.mubr.f32.mxu0 0.0
  %839 = vmatmul.mubr.f32.gmra.mrb[0].mxu0 %v577
  %v840 = vpop.f32.mrb[0].mxu0
  %v841 = vadd.f32 %v564, %v840
  %v842 = vpop.f32.mrb[0].mxu0
  %843 = vmatprep.mubr.f32.mxu0 0.0
  %844 = vmatmul.mubr.f32.gmra.mrb[0].mxu0 %v580
  %v845 = vpop.f32.mrb[0].mxu0
  %v846 = vadd.f32 %v564, %v845
  %v847 = vpop.f32.mrb[0].mxu0
  %848 = vmatprep.mubr.f32.mxu0 0.0
  %849 = vmatmul.mubr.f32.gmra.mrb[0].mxu0 %v583
  %v850 = vpop.f32.mrb[0].mxu0
  %v851 = vadd.f32 %v564, %v850
  %v852 = vpop.f32.mrb[0].mxu0
  %853 = vmatprep.mubr.f32.mxu0 0.0
  %854 = vmatmul.mubr.f32.gmra.mrb[0].mxu0 %v586
  %v855 = vpop.f32.mrb[0].mxu0
  %v856 = vadd.f32 %v564, %v855
  %v857 = vpop.f32.mrb[0].mxu0
  %858 = vmatprep.mubr.f32.mxu0 0.0
  %859 = vmatmul.mubr.f32.gmra.mrb[0].mxu0 %v589
  %v860 = vpop.f32.mrb[0].mxu0
  %v861 = vadd.f32 %v564, %v860
  %v862 = vpop.f32.mrb[0].mxu0
  %863 = vmatprep.mubr.f32.mxu0 0.0
  %864 = vmatmul.mubr.f32.gmra.mrb[0].mxu0 %v592
  %v865 = vpop.f32.mrb[0].mxu0
  %v866 = vadd.f32 %v564, %v865
  %v867 = vpop.f32.mrb[0].mxu0
  %868 = vmatprep.mubr.f32.mxu0 0.0
  %869 = vmatmul.mubr.f32.gmra.mrb[0].mxu0 %v595
  %v870 = vpop.f32.mrb[0].mxu0
  %v871 = vadd.f32 %v564, %v870
  %v872 = vpop.f32.mrb[0].mxu0
  %873 = vmatprep.mubr.f32.mxu0 0.0
  %874 = vmatmul.mubr.f32.gmra.mrb[0].mxu0 %v598
  %v875 = vpop.f32.mrb[0].mxu0
  %v876 = vadd.f32 %v564, %v875
  %v877 = vpop.f32.mrb[0].mxu0
  %878 = vmatprep.mubr.f32.mxu0 0.0
  %879 = vmatmul.mubr.f32.gmra.mrb[0].mxu0 %v601
  %v880 = vpop.f32.mrb[0].mxu0
  %v881 = vadd.f32 %v564, %v880
  %v882 = vpop.f32.mrb[0].mxu0
  %883 = vmatprep.mubr.f32.mxu0 0.0
  %884 = vmatmul.mubr.f32.gmra.mrb[0].mxu0 %v604
  %v885 = vpop.f32.mrb[0].mxu0
  %v886 = vadd.f32 %v564, %v885
  %v887 = vpop.f32.mrb[0].mxu0
  %888 = vmatprep.mubr.f32.mxu0 0.0
  %889 = vmatmul.mubr.f32.gmra.mrb[0].mxu0 %v607
  %v890 = vpop.f32.mrb[0].mxu0
  %v891 = vadd.f32 %v564, %v890
  %v892 = vpop.f32.mrb[0].mxu0
  %893 = vmatprep.mubr.f32.mxu0 0.0
  %894 = vmatmul.mubr.f32.gmra.mrb[0].mxu0 %v610
  %v895 = vpop.f32.mrb[0].mxu0
  %v896 = vadd.f32 %v564, %v895
  %v897 = vpop.f32.mrb[0].mxu0
  %898 = vmatprep.mubr.f32.mxu0 0.0
  %899 = vmatmul.mubr.f32.gmra.mrb[0].mxu0 %v613
  %v900 = vpop.f32.mrb[0].mxu0
  %v901 = vadd.f32 %v564, %v900
  %v902 = vpop.f32.mrb[0].mxu0
  %903 = vmatprep.mubr.f32.mxu0 0.0
  %904 = vmatmul.mubr.f32.gmra.mrb[0].mxu0 %v616
  %v905 = vpop.f32.mrb[0].mxu0
  %v906 = vadd.f32 %v564, %v905
  %v907 = vpop.f32.mrb[0].mxu0
  %908 = vmatprep.mubr.f32.mxu0 0.0
  %909 = vmatmul.mubr.f32.gmra.mrb[0].mxu0 %v619
  %v910 = vpop.f32.mrb[0].mxu0
  %v911 = vadd.f32 %v564, %v910
  %v912 = vpop.f32.mrb[0].mxu0
  %913 = vmatprep.mubr.f32.mxu0 0.0
  %914 = vmatmul.mubr.f32.gmra.mrb[0].mxu0 %v622
  %v915 = vpop.f32.mrb[0].mxu0
  %v916 = vadd.f32 %v564, %v915
  %v917 = vpop.f32.mrb[0].mxu0
  %918 = vmatprep.mubr.f32.mxu0 0.0
  %919 = vmatmul.mubr.f32.gmra.mrb[0].mxu0 %v625
  %v920 = vpop.f32.mrb[0].mxu0
  %v921 = vadd.f32 %v564, %v920
  %v922 = vpop.f32.mrb[0].mxu0
  %923 = vmatprep.mubr.f32.mxu0 0.0
  %924 = vmatmul.mubr.f32.gmra.mrb[0].mxu0 %v628
  %v925 = vpop.f32.mrb[0].mxu0
  %v926 = vadd.f32 %v564, %v925
  %v927 = vpop.f32.mrb[0].mxu0
  %928 = vmatprep.mubr.f32.mxu0 0.0
  %929 = vmatmul.mubr.f32.gmra.mrb[0].mxu0 %v631
  %v930 = vpop.f32.mrb[0].mxu0
  %v931 = vadd.f32 %v564, %v930
  %v932 = vpop.f32.mrb[0].mxu0
  %933 = vmatprep.mubr.f32.mxu0 0.0
  %934 = vmatmul.mubr.f32.gmra.mrb[0].mxu0 %v634
  %v935 = vpop.f32.mrb[0].mxu0
  %v936 = vadd.f32 %v564, %v935
  %v937 = vpop.f32.mrb[0].mxu0
  %938 = vmatprep.mubr.f32.mxu0 0.0
  %939 = vmatmul.mubr.f32.gmra.mrb[0].mxu0 %v637
  %v940 = vpop.f32.mrb[0].mxu0
  %v941 = vadd.f32 %v564, %v940
  %v942 = vpop.f32.mrb[0].mxu0
  %943 = vmatprep.mubr.f32.mxu0 0.0
  %944 = vmatmul.mubr.f32.gmra.mrb[0].mxu0 %v640
  %v945 = vpop.f32.mrb[0].mxu0
  %v946 = vadd.f32 %v564, %v945
  %v947 = vpop.f32.mrb[0].mxu0
  %948 = vmatprep.mubr.f32.mxu0 0.0
  %949 = vmatmul.mubr.f32.gmra.mrb[0].mxu0 %v643
  %v950 = vpop.f32.mrb[0].mxu0
  %v951 = vadd.f32 %v564, %v950
  %v952 = vpop.f32.mrb[0].mxu0
  %953 = vmatprep.mubr.f32.mxu0 0.0
  %954 = vmatmul.mubr.f32.gmra.mrb[0].mxu0 %v646
  %v955 = vpop.f32.mrb[0].mxu0
  %v956 = vadd.f32 %v564, %v955
  %v957 = vpop.f32.mrb[0].mxu0
  %958 = vmatprep.mubr.f32.mxu0 0.0
  %959 = vmatmul.mubr.f32.gmra.mrb[0].mxu0 %v649
  %v960 = vpop.f32.mrb[0].mxu0
  %v961 = vadd.f32 %v564, %v960
  %v962 = vpop.f32.mrb[0].mxu0
  %963 = vmatprep.mubr.f32.mxu0 0.0
  %964 = vmatmul.mubr.f32.gmra.mrb[0].mxu0 %v652
  %v965 = vpop.f32.mrb[0].mxu0
  %v966 = vadd.f32 %v564, %v965
  %v967 = vpop.f32.mrb[0].mxu0
  %968 = vmatprep.mubr.f32.mxu0 0.0
  %969 = vmatmul.mubr.f32.gmra.mrb[0].mxu0 %v655
  %v970 = vpop.f32.mrb[0].mxu0
  %v971 = vadd.f32 %v564, %v970
  %v972 = vpop.f32.mrb[0].mxu0
  %973 = vmatprep.mubr.f32.mxu0 0.0
  %974 = vmatmul.mubr.f32.gmra.mrb[0].mxu0 %v658
  %v975 = vpop.f32.mrb[0].mxu0
  %v976 = vadd.f32 %v564, %v975
  %v977 = vpop.f32.mrb[0].mxu0
  %978 = vmatprep.mubr.f32.mxu0 0.0
  %979 = vmatmul.mubr.f32.gmra.mrb[0].mxu0 %v661
  %v980 = vpop.f32.mrb[0].mxu0
  %v981 = vadd.f32 %v564, %v980
  %v982 = vpop.f32.mrb[0].mxu0
  %983 = vmatprep.mubr.f32.mxu0 0.0
  %984 = vmatmul.mubr.f32.gmra.mrb[0].mxu0 %v664
  %v985 = vpop.f32.mrb[0].mxu0
  %v986 = vadd.f32 %v564, %v985
  %v987 = vpop.f32.mrb[0].mxu0
  %988 = vmatprep.mubr.f32.mxu0 0.0
  %989 = vmatmul.mubr.f32.gmra.mrb[0].mxu0 %v667
  %v990 = vpop.f32.mrb[0].mxu0
  %v991 = vadd.f32 %v564, %v990
  %v992 = vpop.f32.mrb[0].mxu0
  %993 = vmatprep.mubr.f32.mxu0 0.0
  %994 = vmatmul.mubr.f32.gmra.mrb[0].mxu0 %v670
  %v995 = vpop.f32.mrb[0].mxu0
  %v996 = vadd.f32 %v564, %v995
  %v997 = vpop.f32.mrb[0].mxu0
  %998 = vmatprep.mubr.f32.mxu0 0.0
  %999 = vmatmul.mubr.f32.gmra.mrb[0].mxu0 %v673
  %v1000 = vpop.f32.mrb[0].mxu0
  %v1001 = vadd.f32 %v564, %v1000
  %v1002 = vpop.f32.mrb[0].mxu0
  %1003 = vmatprep.mubr.f32.mxu0 0.0
  %1004 = vmatmul.mubr.f32.gmra.mrb[0].mxu0 %v676
  %v1005 = vpop.f32.mrb[0].mxu0
  %v1006 = vadd.f32 %v564, %v1005
  %v1007 = vpop.f32.mrb[0].mxu0
  %1008 = vmatprep.mubr.f32.mxu0 0.0
  %1009 = vmatmul.mubr.f32.gmra.mrb[0].mxu0 %v679
  %v1010 = vpop.f32.mrb[0].mxu0
  %v1011 = vadd.f32 %v564, %v1010
  %v1012 = vpop.f32.mrb[0].mxu0
  %1013 = vmatprep.mubr.f32.mxu0 0.0
  %1014 = vmatmul.mubr.f32.gmra.mrb[0].mxu0 %v682
  %v1015 = vpop.f32.mrb[0].mxu0
  %v1016 = vadd.f32 %v564, %v1015
  %v1017 = vpop.f32.mrb[0].mxu0
  %1018 = vmatprep.mubr.f32.mxu0 0.0
  %1019 = vmatmul.mubr.f32.gmra.mrb[0].mxu0 %v685
  %v1020 = vpop.f32.mrb[0].mxu0
  %v1021 = vadd.f32 %v564, %v1020
  %v1022 = vpop.f32.mrb[0].mxu0
  %1023 = vmatprep.mubr.f32.mxu0 0.0
  %1024 = vmatmul.mubr.f32.gmra.mrb[0].mxu0 %v688
  %v1025 = vpop.f32.mrb[0].mxu0
  %v1026 = vadd.f32 %v564, %v1025
  %v1027 = vpop.f32.mrb[0].mxu0
  %1028 = vmatprep.mubr.f32.mxu0 0.0
  %1029 = vmatmul.mubr.f32.gmra.mrb[0].mxu0 %v691
  %v1030 = vpop.f32.mrb[0].mxu0
  %v1031 = vadd.f32 %v564, %v1030
  %v1032 = vpop.f32.mrb[0].mxu0
  %1033 = vmatprep.mubr.f32.mxu0 0.0
  %1034 = vmatmul.mubr.f32.gmra.mrb[0].mxu0 %v694
  %v1035 = vpop.f32.mrb[0].mxu0
  %v1036 = vadd.f32 %v564, %v1035
  %v1037 = vpop.f32.mrb[0].mxu0
  %1038 = vmatprep.mubr.f32.mxu0 0.0
  %1039 = vmatmul.mubr.f32.gmra.mrb[0].mxu0 %v697
  %v1040 = vpop.f32.mrb[0].mxu0
  %v1041 = vadd.f32 %v564, %v1040
  %v1042 = vpop.f32.mrb[0].mxu0
  %1043 = vmatprep.mubr.f32.mxu0 0.0
  %1044 = vmatmul.mubr.f32.gmra.mrb[0].mxu0 %v700
  %v1045 = vpop.f32.mrb[0].mxu0
  %v1046 = vadd.f32 %v564, %v1045
  %v1047 = vpop.f32.mrb[0].mxu0
  %1048 = vmatprep.mubr.f32.mxu0 0.0
  %1049 = vmatmul.mubr.f32.gmra.mrb[0].mxu0 %v703
  %v1050 = vpop.f32.mrb[0].mxu0
  %v1051 = vadd.f32 %v564, %v1050
  %v1052 = vpop.f32.mrb[0].mxu0
  %1053 = vmatprep.mubr.f32.mxu0 0.0
  %1054 = vmatmul.mubr.f32.gmra.mrb[0].mxu0 %v706
  %v1055 = vpop.f32.mrb[0].mxu0
  %v1056 = vadd.f32 %v564, %v1055
  %v1057 = vpop.f32.mrb[0].mxu0
  %1058 = vmatprep.mubr.f32.mxu0 0.0
  %1059 = vmatmul.mubr.f32.gmra.mrb[0].mxu0 %v709
  %v1060 = vpop.f32.mrb[0].mxu0
  %v1061 = vadd.f32 %v564, %v1060
  %v1062 = vpop.f32.mrb[0].mxu0
  %1063 = vmatprep.mubr.f32.mxu0 0.0
  %1064 = vmatmul.mubr.f32.gmra.mrb[0].mxu0 %v712
  %v1065 = vpop.f32.mrb[0].mxu0
  %v1066 = vadd.f32 %v564, %v1065
  %v1067 = vpop.f32.mrb[0].mxu0
  %1068 = vmatprep.mubr.f32.mxu0 0.0
  %1069 = vmatmul.mubr.f32.gmra.mrb[0].mxu0 %v715
  %v1070 = vpop.f32.mrb[0].mxu0
  %v1071 = vadd.f32 %v564, %v1070
  %v1072 = vpop.f32.mrb[0].mxu0
  %1073 = vmatprep.mubr.f32.mxu0 0.0
  %1074 = vmatmul.mubr.f32.gmra.mrb[0].mxu0 %v718
  %v1075 = vpop.f32.mrb[0].mxu0
  %v1076 = vadd.f32 %v564, %v1075
  %v1077 = vpop.f32.mrb[0].mxu0
  %1078 = vmatprep.mubr.f32.mxu0 0.0
  %1079 = vmatmul.mubr.f32.gmra.mrb[0].mxu0 %v721
  %v1080 = vpop.f32.mrb[0].mxu0
  %v1081 = vadd.f32 %v564, %v1080
  %v1082 = vpop.f32.mrb[0].mxu0
  %1083 = vmatprep.mubr.f32.mxu0 0.0
  %1084 = vmatmul.mubr.f32.gmra.mrb[0].mxu0 %v724
  %v1085 = vpop.f32.mrb[0].mxu0
  %v1086 = vadd.f32 %v564, %v1085
  %v1087 = vpop.f32.mrb[0].mxu0
  %1088 = vmatprep.mubr.f32.mxu0 0.0
  %1089 = vmatmul.mubr.f32.gmra.mrb[0].mxu0 %v727
  %v1090 = vpop.f32.mrb[0].mxu0
  %v1091 = vadd.f32 %v564, %v1090
  %v1092 = vpop.f32.mrb[0].mxu0
  %1093 = vmatprep.mubr.f32.mxu0 0.0
  %1094 = vmatmul.mubr.f32.gmra.mrb[0].mxu0 %v730
  %v1095 = vpop.f32.mrb[0].mxu0
  %v1096 = vadd.f32 %v564, %v1095
  %v1097 = vpop.f32.mrb[0].mxu0
  %1098 = vmatprep.mubr.f32.mxu0 0.0
  %1099 = vmatmul.mubr.f32.gmra.mrb[0].mxu0 %v733
  %v1100 = vpop.f32.mrb[0].mxu0
  %v1101 = vadd.f32 %v564, %v1100
  %v1102 = vpop.f32.mrb[0].mxu0
  %1103 = vmatprep.mubr.f32.mxu0 0.0
  %1104 = vmatmul.mubr.f32.gmra.mrb[0].mxu0 %v736
  %v1105 = vpop.f32.mrb[0].mxu0
  %v1106 = vadd.f32 %v564, %v1105
  %v1107 = vpop.f32.mrb[0].mxu0
  %1108 = vmatprep.mubr.f32.mxu0 0.0
  %1109 = vmatmul.mubr.f32.gmra.mrb[0].mxu0 %v739
  %v1110 = vpop.f32.mrb[0].mxu0
  %v1111 = vadd.f32 %v564, %v1110
  %v1112 = vpop.f32.mrb[0].mxu0
  %1113 = vmatprep.mubr.f32.mxu0 0.0
  %1114 = vmatmul.mubr.f32.gmra.mrb[0].mxu0 %v742
  %v1115 = vpop.f32.mrb[0].mxu0
  %v1116 = vadd.f32 %v564, %v1115
  %v1117 = vpop.f32.mrb[0].mxu0
  %1118 = vmatprep.mubr.f32.mxu0 0.0
  %1119 = vmatmul.mubr.f32.gmra.mrb[0].mxu0 %v745
  %v1120 = vpop.f32.mrb[0].mxu0
  %v1121 = vadd.f32 %v564, %v1120
  %v1122 = vpop.f32.mrb[0].mxu0
  %1123 = vmatprep.mubr.f32.mxu0 0.0
  %1124 = vmatmul.mubr.f32.gmra.mrb[0].mxu0 %v748
  %v1125 = vpop.f32.mrb[0].mxu0
  %v1126 = vadd.f32 %v564, %v1125
  %v1127 = vpop.f32.mrb[0].mxu0
  %1128 = vmatprep.mubr.f32.mxu0 0.0
  %1129 = vmatmul.mubr.f32.gmra.mrb[0].mxu0 %v751
  %v1130 = vpop.f32.mrb[0].mxu0
  %v1131 = vadd.f32 %v564, %v1130
  %v1132 = vpop.f32.mrb[0].mxu0
  %1133 = vmatprep.mubr.f32.mxu0 0.0
  %1134 = vmatmul.mubr.f32.gmra.mrb[0].mxu0 %v754
  %v1135 = vpop.f32.mrb[0].mxu0
  %v1136 = vadd.f32 %v564, %v1135
  %v1137 = vpop.f32.mrb[0].mxu0
  %1138 = vmatprep.mubr.f32.mxu0 0.0
  %1139 = vmatmul.mubr.f32.gmra.mrb[0].mxu0 %v757
  %v1140 = vpop.f32.mrb[0].mxu0
  %v1141 = vadd.f32 %v564, %v1140
  %v1142 = vpop.f32.mrb[0].mxu0
  %1143 = vdwg.mxu0
  %1144 = vst [vmem:[%s5] sm:$0xff] %v826
  %1145 = vst [vmem:[%s5 + $0x8] sm:$0xff] %v831
  %1146 = vst [vmem:[%s5 + $0x10] sm:$0xff] %v836
  %1147 = vst [vmem:[%s5 + $0x18] sm:$0xff] %v841
  %1148 = vst [vmem:[%s5 + $0x20] sm:$0xff] %v846
  %1149 = vst [vmem:[%s5 + $0x28] sm:$0xff] %v851
  %1150 = vst [vmem:[%s5 + $0x30] sm:$0xff] %v856
  %1151 = vst [vmem:[%s5 + $0x38] sm:$0xff] %v861
  %1152 = vst [vmem:[%s5 + $0x40] sm:$0xff] %v866
  %1153 = vst [vmem:[%s5 + $0x48] sm:$0xff] %v871
  %1154 = vst [vmem:[%s5 + $0x50] sm:$0xff] %v876
  %1155 = vst [vmem:[%s5 + $0x58] sm:$0xff] %v881
  %1156 = vst [vmem:[%s5 + $0x60] sm:$0xff] %v886
  %1157 = vst [vmem:[%s5 + $0x68] sm:$0xff] %v891
  %1158 = vst [vmem:[%s5 + $0x70] sm:$0xff] %v896
  %1159 = vst [vmem:[%s5 + $0x78] sm:$0xff] %v901
  %1160 = vst [vmem:[%s5 + $0x80] sm:$0xff] %v906
  %1161 = vst [vmem:[%s5 + $0x88] sm:$0xff] %v911
  %1162 = vst [vmem:[%s5 + $0x90] sm:$0xff] %v916
  %1163 = vst [vmem:[%s5 + $0x98] sm:$0xff] %v921
  %1164 = vst [vmem:[%s5 + $0xa0] sm:$0xff] %v926
  %1165 = vst [vmem:[%s5 + $0xa8] sm:$0xff] %v931
  %1166 = vst [vmem:[%s5 + $0xb0] sm:$0xff] %v936
  %1167 = vst [vmem:[%s5 + $0xb8] sm:$0xff] %v941
  %1168 = vst [vmem:[%s5 + $0xc0] sm:$0xff] %v946
  %1169 = vst [vmem:[%s5 + $0xc8] sm:$0xff] %v951
  %1170 = vst [vmem:[%s5 + $0xd0] sm:$0xff] %v956
  %1171 = vst [vmem:[%s5 + $0xd8] sm:$0xff] %v961
  %1172 = vst [vmem:[%s5 + $0xe0] sm:$0xff] %v966
  %1173 = vst [vmem:[%s5 + $0xe8] sm:$0xff] %v971
  %1174 = vst [vmem:[%s5 + $0xf0] sm:$0xff] %v976
  %1175 = vst [vmem:[%s5 + $0xf8] sm:$0xff] %v981
  %1176 = vst [vmem:[%s5 + $0x100] sm:$0xff] %v986
  %1177 = vst [vmem:[%s5 + $0x108] sm:$0xff] %v991
  %1178 = vst [vmem:[%s5 + $0x110] sm:$0xff] %v996
  %1179 = vst [vmem:[%s5 + $0x118] sm:$0xff] %v1001
  %1180 = vst [vmem:[%s5 + $0x120] sm:$0xff] %v1006
  %1181 = vst [vmem:[%s5 + $0x128] sm:$0xff] %v1011
  %1182 = vst [vmem:[%s5 + $0x130] sm:$0xff] %v1016
  %1183 = vst [vmem:[%s5 + $0x138] sm:$0xff] %v1021
  %1184 = vst [vmem:[%s5 + $0x140] sm:$0xff] %v1026
  %1185 = vst [vmem:[%s5 + $0x148] sm:$0xff] %v1031
  %1186 = vst [vmem:[%s5 + $0x150] sm:$0xff] %v1036
  %1187 = vst [vmem:[%s5 + $0x158] sm:$0xff] %v1041
  %1188 = vst [vmem:[%s5 + $0x160] sm:$0xff] %v1046
  %1189 = vst [vmem:[%s5 + $0x168] sm:$0xff] %v1051
  %1190 = vst [vmem:[%s5 + $0x170] sm:$0xff] %v1056
  %1191 = vst [vmem:[%s5 + $0x178] sm:$0xff] %v1061
  %1192 = vst [vmem:[%s5 + $0x180] sm:$0xff] %v1066
  %1193 = vst [vmem:[%s5 + $0x188] sm:$0xff] %v1071
  %1194 = vst [vmem:[%s5 + $0x190] sm:$0xff] %v1076
  %1195 = vst [vmem:[%s5 + $0x198] sm:$0xff] %v1081
  %1196 = vst [vmem:[%s5 + $0x1a0] sm:$0xff] %v1086
  %1197 = vst [vmem:[%s5 + $0x1a8] sm:$0xff] %v1091
  %1198 = vst [vmem:[%s5 + $0x1b0] sm:$0xff] %v1096
  %1199 = vst [vmem:[%s5 + $0x1b8] sm:$0xff] %v1101
  %1200 = vst [vmem:[%s5 + $0x1c0] sm:$0xff] %v1106
  %1201 = vst [vmem:[%s5 + $0x1c8] sm:$0xff] %v1111
  %1202 = vst [vmem:[%s5 + $0x1d0] sm:$0xff] %v1116
  %1203 = vst [vmem:[%s5 + $0x1d8] sm:$0xff] %v1121
  %1204 = vst [vmem:[%s5 + $0x1e0] sm:$0xff] %v1126
  %1205 = vst [vmem:[%s5 + $0x1e8] sm:$0xff] %v1131
  %1206 = vst [vmem:[%s5 + $0x1f0] sm:$0xff] %v1136
  %1207 = vst [vmem:[%s5 + $0x1f8] sm:$0xff] %v1141
  // Predicated region
  $region22: #{aspp_forward.1} parent=0 // pred_check
    _
  $region23: #{aspp_forward.1} parent=0 // pred_check_branch
    %1209 = sbr.rel (0) target = $region25
  $region24: #{aspp_forward.1} parent=0 // pred_region
    _
  $region25: #{aspp_forward.1} parent=0 // pred_fallthru
    _
  // Predicated region
  $region26: #{aspp_forward.1} parent=0 // pred_check
    _
  $region27: #{aspp_forward.1} parent=0 // pred_check_branch
    %1211 = sbr.rel (0) target = $region29
  $region28: #{aspp_forward.1} parent=0 // pred_region
    _
  $region29: #{aspp_forward.1} parent=0 // pred_fallthru
    _

</llo_original>
